<compile_context>
chip_gen: v7x
topology: tpu7x:2x2x1
jax: 0.10.0
libtpu: 0.0.40
codegen_flags: <defaults>
</compile_context>

<pallas_src>
import jax
import jax.numpy as jnp
import numpy as np
from jax.experimental import pallas as pl
from jax.experimental.pallas import tpu as pltpu

_LANE_CANDIDATES = (2048, 1024, 512, 256, 128)
_SUBLANE = 32                        # uint8 native (32, 128) packed tile
_INV_255 = np.float32(1.0 / 255.0)   # matches x / 255.0 to within 1 ulp


def _rgb_to_unit_float_kernel(x_ref, o_ref):
    """Elementwise o = float32(x) * (1/255) on one [block_rows, lane] tile."""
    o_ref[...] = x_ref[...].astype(jnp.float32) * _INV_255


def _round_up(x, m):
    return ((x + m - 1) // m) * m


def rgb_to_float_zero_one(video, *, block_elems=8192 * 128):
    """float32(video) / 255 via a lane-dense streaming Pallas kernel.

    Equivalent to torch: video.to(torch.float32).div(255.0), for any shape and
    any integer/float input dtype.
    """
    orig_shape = video.shape
    flat = jnp.ravel(video)
    n = int(flat.shape[0])
    if n == 0:
        return flat.astype(jnp.float32).reshape(orig_shape)

    # Lane width: widest multiple of 128 that divides n (longer contiguous DMA
    # rows / vst runs); fall back to 128 with a minimal pad for odd sizes.
    lane = next((l for l in _LANE_CANDIDATES if n % l == 0), None)
    padded = lane is None
    if padded:
        lane = 128
        n_pad = _round_up(n, lane)
        # TODO(synk): this rare path (n % 128 != 0) materializes a pad copy and
        # an output slice; common video shapes take the zero-copy branch.
        flat = jnp.pad(flat, (0, n_pad - n))
    else:
        n_pad = n
    rows = n_pad // lane
    x2d = flat.reshape(rows, lane)

    # Block rows: multiple of 32 (uint8 native sublane packing), sized so each
    # grid step streams ~block_elems elements.  Double-buffered footprint at the
    # default is ~10 MiB -> fits v5e/v6e/v7x scoped VMEM.
    if rows <= _SUBLANE:
        block_rows = rows                      # single full block (= full dims)
    else:
        target = max(_SUBLANE, (block_elems // lane) // _SUBLANE * _SUBLANE)
        block_rows = min(target, (rows // _SUBLANE) * _SUBLANE)
        # Guarantee >= 2 grid steps when there is enough work so the "parallel"
        # axis can shard across v7x's two TensorCores (no-op on v5e/v6e).
        if pl.cdiv(rows, block_rows) < 2 and rows >= 2 * _SUBLANE:
            block_rows = max(_SUBLANE, _round_up(pl.cdiv(rows, 2), _SUBLANE))
    grid = (pl.cdiv(rows, block_rows),)

    in_bytes = np.dtype(video.dtype).itemsize
    out2d = pl.pallas_call(
        _rgb_to_unit_float_kernel,
        out_shape=jax.ShapeDtypeStruct((rows, lane), jnp.float32),
        grid=grid,
        in_specs=[pl.BlockSpec((block_rows, lane), lambda i: (i, 0))],
        out_specs=pl.BlockSpec((block_rows, lane), lambda i: (i, 0)),
        compiler_params=pltpu.CompilerParams(
            dimension_semantics=("parallel",),
            vmem_limit_bytes=32 * 1024 * 1024),
        cost_estimate=pl.CostEstimate(
            flops=n_pad,
            transcendentals=0,
            bytes_accessed=n_pad * (in_bytes + 4)),
    )(x2d)

    out = out2d.reshape(-1)
    if padded:
        out = out[:n]
    return out.reshape(orig_shape)


class RGBToFloatToZeroOne:
    """JAX/Pallas port of the PyTorch RGBToFloatToZeroOne module."""

    def __init__(self, block_elems=8192 * 128):
        self.block_elems = block_elems

    def forward(self, item):
        item["video"] = rgb_to_float_zero_one(
            item["video"], block_elems=self.block_elems)
        return item

    __call__ = forward


if __name__ == "__main__":
    key = jax.random.PRNGKey(0)
    k0, k1, k2 = jax.random.split(key, 3)

    # Small uint8 RGB video: [batch=2, frames=4, channels=3, H=32, W=32].
    video_u8 = jax.random.randint(
        k0, (2, 4, 3, 32, 32), 0, 256, dtype=jnp.int32).astype(jnp.uint8)
    item = {"video": video_u8}

    mod = RGBToFloatToZeroOne()
    out = jax.block_until_ready(mod(item)["video"])
    ref = np.asarray(video_u8).astype(np.float32) / np.float32(255.0)
    assert out.shape == video_u8.shape
    assert out.dtype == jnp.float32
    np.testing.assert_allclose(np.asarray(out), ref, rtol=1e-6, atol=1e-7)

    # Multi-step grid + masked partial last block (rows=153, block_rows=64 -> 3 steps).
    video_b = jax.random.randint(
        k1, (2, 3, 3, 17, 64), 0, 256, dtype=jnp.int32).astype(jnp.uint8)
    ref_b = np.asarray(video_b).astype(np.float32) / np.float32(255.0)
    out_b = jax.block_until_ready(
        rgb_to_float_zero_one(video_b, block_elems=64 * 128))
    np.testing.assert_allclose(np.asarray(out_b), ref_b, rtol=1e-6, atol=1e-7)

    # Rare fallback: element count not a multiple of 128 (pad + slice path).
    video_c = jax.random.randint(
        k2, (3, 5, 7), 0, 256, dtype=jnp.int32).astype(jnp.uint8)
    ref_c = np.asarray(video_c).astype(np.float32) / np.float32(255.0)
    out_c = jax.block_until_ready(rgb_to_float_zero_one(video_c))
    np.testing.assert_allclose(np.asarray(out_c), ref_c, rtol=1e-6, atol=1e-7)

    print("KERNEL_OK")
</pallas_src>

<mosaic_0001>
module attributes {stable_mosaic.version = 11 : i64} {
  func.func @_rgb_to_unit_float_kernel(%arg0: i32, %arg1: memref<12x2048xi8, #tpu.memory_space<vmem>>, %arg2: memref<12x2048xf32, #tpu.memory_space<vmem>>) attributes {dimension_semantics = [#tpu.dimension_semantics<parallel>], iteration_bounds = array<i64: 1>, scalar_prefetch = 0 : i64, scratch_operands = 0 : i64, tpu.core_type = #tpu.core_type<tc>, window_params = [{transform_indices = @transform_0, window_bounds = array<i64: 12, 2048>}, {transform_indices = @transform_1, window_bounds = array<i64: 12, 2048>}]} {
    %c0 = arith.constant 0 : index
    %c0_0 = arith.constant 0 : index
    %0 = vector.load %arg1[%c0, %c0_0] : memref<12x2048xi8, #tpu.memory_space<vmem>>, vector<12x2048xi8>
    %1 = arith.uitofp %0 : vector<12x2048xi8> to vector<12x2048xf32>
    %cst = arith.constant 0.00392156886 : f32
    %2 = vector.broadcast %cst : f32 to vector<12x2048xf32>
    %3 = arith.mulf %1, %2 : vector<12x2048xf32>
    %c0_1 = arith.constant 0 : index
    %c0_2 = arith.constant 0 : index
    %4 = vector.load %arg2[%c0_1, %c0_2] : memref<12x2048xf32, #tpu.memory_space<vmem>>, vector<12x2048xf32>
    tpu.vector_store %arg2[%c0_1, %c0_2], %3 {strides = array<i32>} : memref<12x2048xf32, #tpu.memory_space<vmem>>, vector<12x2048xf32>,
    return
  }
  func.func @transform_0(%arg0: i32) -> (i32, i32) {
    %c0_i32 = arith.constant 0 : i32
    %c0_i32_0 = arith.constant 0 : i32
    return %arg0, %c0_i32 : i32, i32
  }
  func.func @transform_1(%arg0: i32) -> (i32, i32) {
    %c0_i32 = arith.constant 0 : i32
    %c0_i32_0 = arith.constant 0 : i32
    return %arg0, %c0_i32 : i32, i32
  }
}

</mosaic_0001>

<llo_original>
// kernel: tpu_custom_call.1
$region0: #{tpu_custom_call.1}
  #allocation0 [shape = 'u32[]', space=smem, size = 0x4, offset = 0x4, fixed_abs, tag = 'smem constant byte address 0x4 - core index']
  #allocation1 [shape = 'u32[144,128]{1,0:T(1,128)}', space=vmem, size = 0x12000, scoped, tag = 'internal scratch']
  %s0 = inlined_call_operand.hbm [shape: u8[12,2048], index: 0, kind: input, shape index: {}]
  %s1 = inlined_call_operand.hbm [shape: f32[12,2048], index: 1, kind: output, shape index: {}]
  %s2 = sld [smem:[#allocation0]]
  $region18: #{tpu_custom_call.1} parent=0
    _
  %s4 = ssub.s32 1, %s2
  %s5 = scalar_select 0, %s4, %s2
  $region1: #{tpu_custom_call.1} parent=0
    #allocation2 [shape = 'u8[32768]{0}', space=vmem, size = 0x8000, scoped, tag = 'input window, operand 0, single buffered']
    #allocation3 [shape = 's32[1]{0}', space=sflag, size = 0x4, scoped, tag = 'scoped memory for tpu_custom_call.1']
    #allocation4 [shape = 's32[1]{0}', space=sflag, size = 0x4, scoped, tag = 'scoped memory for tpu_custom_call.1']
    #allocation5 [shape = 'u8[131072]{0}', space=vmem, size = 0x20000, scoped, tag = 'output window, operand 0, single buffered']
    %6 = vsyncpa [#allocation3], 0
    %7 = vsyncpa [#allocation4], 0
    // Predicated region
    $region2: #{tpu_custom_call.1} parent=1 // pred_check
      _
    $region3: #{tpu_custom_call.1} parent=1 // pred_check_branch
      %9 = sbr.rel (0) target = $region5
    $region4: #{tpu_custom_call.1} parent=1 // pred_region
      %s11 = ssub.s32 1024, 1024
      %12 = vsyncadd [#allocation3], %s11
      %s13 = sshll.u32 [#allocation2], 4
      %s14 = int_to_ptr.vmem [resolvable:$true] %s13
      %19 = dma.hbm_to_vmem [thread:$0]  %s0, 1024, %s14, [#allocation3], 512, 512, 32
    $region5: #{tpu_custom_call.1} parent=1 // pred_fallthru
      _
    // Predicated region
    $region6: #{tpu_custom_call.1} parent=1 // pred_check
      _
    $region7: #{tpu_custom_call.1} parent=1 // pred_check_branch
      %21 = sbr.rel (0) target = $region9
    $region8: #{tpu_custom_call.1} parent=1 // pred_region
      %22 = dma.done [#allocation3], 1024
    $region9: #{tpu_custom_call.1} parent=1 // pred_fallthru
      _
    %v23 = vld [vmem:[#allocation2] sm:$0xff]
    %v24 = vld [vmem:[#allocation2 + $0x8] sm:$0xff]
    %v25 = vld [vmem:[#allocation2 + $0x10] sm:$0xff]
    %v26 = vld [vmem:[#allocation2 + $0x18] sm:$0xff]
    %v27 = vld [vmem:[#allocation2 + $0x20] sm:$0x55]
    %v28 = vld [vmem:[#allocation2 + $0x28] sm:$0x55]
    %v29 = vld [vmem:[#allocation2 + $0x30] sm:$0x55]
    %v30 = vld [vmem:[#allocation2 + $0x38] sm:$0x55]
    %v31 = vunpack.c.0.s8 %v23
    %v32 = vunpack.c.1.s8 %v23
    %v33 = vunpack.c.2.s8 %v23
    %v34 = vunpack.c.3.s8 %v23
    %v35 = vunpack.c.0.s8 %v24
    %v36 = vunpack.c.1.s8 %v24
    %v37 = vunpack.c.2.s8 %v24
    %v38 = vunpack.c.3.s8 %v24
    %v39 = vunpack.c.0.s8 %v25
    %v40 = vunpack.c.1.s8 %v25
    %v41 = vunpack.c.2.s8 %v25
    %v42 = vunpack.c.3.s8 %v25
    %v43 = vunpack.c.0.s8 %v26
    %v44 = vunpack.c.1.s8 %v26
    %v45 = vunpack.c.2.s8 %v26
    %v46 = vunpack.c.3.s8 %v26
    %v47 = vunpack.c.0.s8 %v27
    %v48 = vunpack.c.1.s8 %v27
    %v49 = vunpack.c.2.s8 %v27
    %v50 = vunpack.c.3.s8 %v27
    %v51 = vunpack.c.0.s8 %v28
    %v52 = vunpack.c.1.s8 %v28
    %v53 = vunpack.c.2.s8 %v28
    %v54 = vunpack.c.3.s8 %v28
    %v55 = vunpack.c.0.s8 %v29
    %v56 = vunpack.c.1.s8 %v29
    %v57 = vunpack.c.2.s8 %v29
    %v58 = vunpack.c.3.s8 %v29
    %v59 = vunpack.c.0.s8 %v30
    %v60 = vunpack.c.1.s8 %v30
    %v61 = vunpack.c.2.s8 %v30
    %v62 = vunpack.c.3.s8 %v30
    %v63 = vand.u32 %v31, 255
    %v64 = vand.u32 %v32, 255
    %v65 = vand.u32 %v33, 255
    %v66 = vand.u32 %v34, 255
    %v67 = vand.u32 %v35, 255
    %v68 = vand.u32 %v36, 255
    %v69 = vand.u32 %v37, 255
    %v70 = vand.u32 %v38, 255
    %v71 = vand.u32 %v39, 255
    %v72 = vand.u32 %v40, 255
    %v73 = vand.u32 %v41, 255
    %v74 = vand.u32 %v42, 255
    %v75 = vand.u32 %v43, 255
    %v76 = vand.u32 %v44, 255
    %v77 = vand.u32 %v45, 255
    %v78 = vand.u32 %v46, 255
    %v79 = vand.u32 %v47, 255
    %v80 = vand.u32 %v48, 255
    %v81 = vand.u32 %v49, 255
    %v82 = vand.u32 %v50, 255
    %v83 = vand.u32 %v51, 255
    %v84 = vand.u32 %v52, 255
    %v85 = vand.u32 %v53, 255
    %v86 = vand.u32 %v54, 255
    %v87 = vand.u32 %v55, 255
    %v88 = vand.u32 %v56, 255
    %v89 = vand.u32 %v57, 255
    %v90 = vand.u32 %v58, 255
    %v91 = vand.u32 %v59, 255
    %v92 = vand.u32 %v60, 255
    %v93 = vand.u32 %v61, 255
    %v94 = vand.u32 %v62, 255
    %v95 = vcvt.s32.f32 %v63
    %v96 = vcvt.s32.f32 %v64
    %v97 = vcvt.s32.f32 %v65
    %v98 = vcvt.s32.f32 %v66
    %v99 = vcvt.s32.f32 %v67
    %v100 = vcvt.s32.f32 %v68
    %v101 = vcvt.s32.f32 %v69
    %v102 = vcvt.s32.f32 %v70
    %v103 = vcvt.s32.f32 %v71
    %v104 = vcvt.s32.f32 %v72
    %v105 = vcvt.s32.f32 %v73
    %v106 = vcvt.s32.f32 %v74
    %v107 = vcvt.s32.f32 %v75
    %v108 = vcvt.s32.f32 %v76
    %v109 = vcvt.s32.f32 %v77
    %v110 = vcvt.s32.f32 %v78
    %v111 = vcvt.s32.f32 %v79
    %v112 = vcvt.s32.f32 %v80
    %v113 = vcvt.s32.f32 %v81
    %v114 = vcvt.s32.f32 %v82
    %v115 = vcvt.s32.f32 %v83
    %v116 = vcvt.s32.f32 %v84
    %v117 = vcvt.s32.f32 %v85
    %v118 = vcvt.s32.f32 %v86
    %v119 = vcvt.s32.f32 %v87
    %v120 = vcvt.s32.f32 %v88
    %v121 = vcvt.s32.f32 %v89
    %v122 = vcvt.s32.f32 %v90
    %v123 = vcvt.s32.f32 %v91
    %v124 = vcvt.s32.f32 %v92
    %v125 = vcvt.s32.f32 %v93
    %v126 = vcvt.s32.f32 %v94
    %v127 = vmul.f32 %v95, 0.003921569
    %v128 = vmul.f32 %v96, 0.003921569
    %v129 = vmul.f32 %v97, 0.003921569
    %v130 = vmul.f32 %v98, 0.003921569
    %v131 = vmul.f32 %v99, 0.003921569
    %v132 = vmul.f32 %v100, 0.003921569
    %v133 = vmul.f32 %v101, 0.003921569
    %v134 = vmul.f32 %v102, 0.003921569
    %v135 = vmul.f32 %v103, 0.003921569
    %v136 = vmul.f32 %v104, 0.003921569
    %v137 = vmul.f32 %v105, 0.003921569
    %v138 = vmul.f32 %v106, 0.003921569
    %v139 = vmul.f32 %v107, 0.003921569
    %v140 = vmul.f32 %v108, 0.003921569
    %v141 = vmul.f32 %v109, 0.003921569
    %v142 = vmul.f32 %v110, 0.003921569
    %v143 = vmul.f32 %v111, 0.003921569
    %v144 = vmul.f32 %v112, 0.003921569
    %v145 = vmul.f32 %v113, 0.003921569
    %v146 = vmul.f32 %v114, 0.003921569
    %v147 = vmul.f32 %v115, 0.003921569
    %v148 = vmul.f32 %v116, 0.003921569
    %v149 = vmul.f32 %v117, 0.003921569
    %v150 = vmul.f32 %v118, 0.003921569
    %v151 = vmul.f32 %v119, 0.003921569
    %v152 = vmul.f32 %v120, 0.003921569
    %v153 = vmul.f32 %v121, 0.003921569
    %v154 = vmul.f32 %v122, 0.003921569
    %v155 = vmul.f32 %v123, 0.003921569
    %v156 = vmul.f32 %v124, 0.003921569
    %v157 = vmul.f32 %v125, 0.003921569
    %v158 = vmul.f32 %v126, 0.003921569
    %159 = vst [vmem:[#allocation5] sm:$0xff] %v127
    %160 = vst [vmem:[#allocation5 + $0x8] sm:$0xff] %v128
    %161 = vst [vmem:[#allocation5 + $0x10] sm:$0xff] %v129
    %162 = vst [vmem:[#allocation5 + $0x18] sm:$0xff] %v130
    %163 = vst [vmem:[#allocation5 + $0x20] sm:$0xff] %v131
    %164 = vst [vmem:[#allocation5 + $0x28] sm:$0xff] %v132
    %165 = vst [vmem:[#allocation5 + $0x30] sm:$0xff] %v133
    %166 = vst [vmem:[#allocation5 + $0x38] sm:$0xff] %v134
    %167 = vst [vmem:[#allocation5 + $0x40] sm:$0xff] %v135
    %168 = vst [vmem:[#allocation5 + $0x48] sm:$0xff] %v136
    %169 = vst [vmem:[#allocation5 + $0x50] sm:$0xff] %v137
    %170 = vst [vmem:[#allocation5 + $0x58] sm:$0xff] %v138
    %171 = vst [vmem:[#allocation5 + $0x60] sm:$0xff] %v139
    %172 = vst [vmem:[#allocation5 + $0x68] sm:$0xff] %v140
    %173 = vst [vmem:[#allocation5 + $0x70] sm:$0xff] %v141
    %174 = vst [vmem:[#allocation5 + $0x78] sm:$0xff] %v142
    %175 = vst [vmem:[#allocation5 + $0x80] sm:$0xf] %v143
    %176 = vst [vmem:[#allocation5 + $0x88] sm:$0xf] %v144
    %177 = vst [vmem:[#allocation5 + $0x90] sm:$0xf] %v145
    %178 = vst [vmem:[#allocation5 + $0x98] sm:$0xf] %v146
    %179 = vst [vmem:[#allocation5 + $0xa0] sm:$0xf] %v147
    %180 = vst [vmem:[#allocation5 + $0xa8] sm:$0xf] %v148
    %181 = vst [vmem:[#allocation5 + $0xb0] sm:$0xf] %v149
    %182 = vst [vmem:[#allocation5 + $0xb8] sm:$0xf] %v150
    %183 = vst [vmem:[#allocation5 + $0xc0] sm:$0xf] %v151
    %184 = vst [vmem:[#allocation5 + $0xc8] sm:$0xf] %v152
    %185 = vst [vmem:[#allocation5 + $0xd0] sm:$0xf] %v153
    %186 = vst [vmem:[#allocation5 + $0xd8] sm:$0xf] %v154
    %187 = vst [vmem:[#allocation5 + $0xe0] sm:$0xf] %v155
    %188 = vst [vmem:[#allocation5 + $0xe8] sm:$0xf] %v156
    %189 = vst [vmem:[#allocation5 + $0xf0] sm:$0xf] %v157
    %190 = vst [vmem:[#allocation5 + $0xf8] sm:$0xf] %v158
    // Predicated region
    $region10: #{tpu_custom_call.1} parent=1 // pred_check
      _
    $region11: #{tpu_custom_call.1} parent=1 // pred_check_branch
      %192 = sbr.rel (0) target = $region13
    $region12: #{tpu_custom_call.1} parent=1 // pred_region
      %s194 = ssub.s32 4096, 4096
      %195 = vsyncadd [#allocation4], %s194
      %s196 = sshll.u32 [#allocation5], 4
      %s197 = int_to_ptr.vmem [resolvable:$true] %s196
      %202 = dma.vmem_to_hbm [thread:$0]  %s197, 4096, %s1, [#allocation4], 2048, 2048, 128
    $region13: #{tpu_custom_call.1} parent=1 // pred_fallthru
      _
    // Predicated region
    $region14: #{tpu_custom_call.1} parent=1 // pred_check
      _
    $region15: #{tpu_custom_call.1} parent=1 // pred_check_branch
      %204 = sbr.rel (0) target = $region17
    $region16: #{tpu_custom_call.1} parent=1 // pred_region
      %205 = dma.done [#allocation4], 4096
    $region17: #{tpu_custom_call.1} parent=1 // pred_fallthru
      _
    %206 = vsyncpa [#allocation3], 1
    %207 = vsyncpa [#allocation4], 1

</llo_original>
